<compile_context>
chip_gen: v7x
topology: tpu7x:2x2x1
jax: 0.10.0
libtpu: 0.0.40
codegen_flags: <defaults>
</compile_context>

<pallas_src>
from typing import NamedTuple

import jax
import jax.numpy as jnp
from jax.experimental import pallas as pl
from jax.experimental.pallas import tpu as pltpu


def _round_up(v, m):
    return (v + m - 1) // m * m


def _chip_config():
    """Per-generation tile defaults and scoped-VMEM limit."""
    kind = ""
    try:
        kind = jax.devices()[0].device_kind.lower()
    except Exception:
        pass
    if "v7" in kind or "7x" in kind:          # v7x: 64 MiB VMEM, 2 TCs/chip
        return dict(tm=512, tn=1024, tk=1024, vmem=48 << 20, cores=2)
    if "v6" in kind or "trillium" in kind:    # v6e: 128 MiB VMEM
        return dict(tm=1024, tn=2048, tk=1024, vmem=96 << 20, cores=1)
    # v5e / unknown: conservative defaults, safe on every generation.
    return dict(tm=512, tn=512, tk=1024, vmem=32 << 20, cores=1)


def _pad2d(arr, rows, cols, dtype):
    """Zero-pad `arr` to (rows, cols) in `dtype`; no-op if already there."""
    r, c = arr.shape
    if (r, c) == (rows, cols) and arr.dtype == dtype:
        return arr
    out = jnp.zeros((rows, cols), dtype)
    return out.at[:r, :c].set(arr.astype(dtype))


class LoRAParams(NamedTuple):
    wt_p: jax.Array     # (kp, np_) bf16  -- W transposed, padded
    bias_p: jax.Array   # (1,  np_) f32
    a_p: jax.Array      # (kp, rp)  bf16
    b_p: jax.Array      # (rp, np_) bf16  -- pre-scaled by alpha/rank
    in_features: int
    out_features: int
    tn: int
    tk: int
    rp: int
    tm_default: int
    vmem_limit: int


def prepare_lora_params(wt, bias, a, b, *, alpha, rank):
    """One-time parameter prep: pad, cast to bf16, fold alpha/rank into B.

    wt   : [in_features, out_features]  (W transposed)
    bias : [out_features]
    a    : [in_features, rank]
    b    : [rank, out_features]
    """
    in_features, out_features = wt.shape
    cfg = _chip_config()

    tn = min(cfg["tn"], _round_up(out_features, 128))
    tk = min(cfg["tk"], _round_up(in_features, 128))
    # Megacore occupancy (v7x): keep >= 2 N-tiles when possible so small-M
    # calls still give both TensorCores work.
    if cfg["cores"] >= 2 and out_features > 128:
        tn = min(tn, _round_up(-(-out_features // 2), 128))

    kp = _round_up(in_features, tk)
    np_ = _round_up(out_features, tn)
    rp = _round_up(rank, 128)     # lane-pad rank so xa / B tiles are lane-dense

    scale = float(alpha) / float(rank)
    wt_p = _pad2d(wt, kp, np_, jnp.bfloat16)
    a_p = _pad2d(a, kp, rp, jnp.bfloat16)
    b_p = _pad2d(b * scale, rp, np_, jnp.bfloat16)        # fold alpha/rank once
    bias_p = _pad2d(bias.reshape(1, -1), 1, np_, jnp.float32)

    return LoRAParams(wt_p, bias_p, a_p, b_p, in_features, out_features,
                      tn, tk, rp, cfg["tm"], cfg["vmem"])


def _lora_kernel(x_ref, wt_ref, bias_ref, xa_ref, b_ref, o_ref, acc_ref):
    """One (tm, tn) output tile; grid axis 2 reduces over in_features.

    acc_ref : f32 (tm, tn) VMEM accumulator for x @ Wt.
    xa_ref  : bf16 (tm, rp) precomputed x @ A (constant over j and k).
    """
    k = pl.program_id(2)

    @pl.when(k == 0)
    def _():
        acc_ref[...] = jnp.zeros_like(acc_ref)

    acc_ref[...] += jnp.dot(x_ref[...], wt_ref[...],
                            preferred_element_type=jnp.float32)

    @pl.when(k == pl.num_programs(2) - 1)
    def _():
        # B is pre-scaled by alpha/rank; bias is f32 (1, tn) and broadcasts.
        lora = jnp.dot(xa_ref[...], b_ref[...],
                       preferred_element_type=jnp.float32)
        o_ref[...] = (acc_ref[...] + bias_ref[...] + lora).astype(o_ref.dtype)


def lora_forward(x, params: LoRAParams):
    """LoRA forward for x of shape [..., in_features]."""
    in_features = params.in_features
    out_features = params.out_features
    tn, tk, rp = params.tn, params.tk, params.rp
    kp, np_ = params.wt_p.shape

    lead_shape = x.shape[:-1]
    x2d = x.reshape(-1, in_features)
    m = x2d.shape[0]

    tm = min(params.tm_default, _round_up(m, 128))
    mp = _round_up(m, tm)

    out_dtype = x.dtype
    out_bytes = jnp.dtype(out_dtype).itemsize

    # Activation padding / bf16 cast (no-op when already aligned).
    x_p = _pad2d(x2d, mp, kp, jnp.bfloat16)

    # Hoisted low-rank projection: tiny (mp, kp) x (kp, rp) matmul done once,
    # f32 accumulate, cast to bf16 for the in-kernel xa @ B epilogue.
    xa = jnp.dot(x_p, params.a_p,
                 preferred_element_type=jnp.float32).astype(jnp.bfloat16)

    ni, nj, nk = mp // tm, np_ // tn, kp // tk
    grid = (ni, nj, nk)

    cost = pl.CostEstimate(
        flops=2 * mp * kp * np_ + 2 * mp * rp * np_,
        transcendentals=0,
        bytes_accessed=(nj * mp * kp * 2          # x streamed once per N-tile
                        + ni * kp * np_ * 2       # Wt streamed once per M-tile
                        + mp * rp * 2             # xa (resident over j, k)
                        + ni * rp * np_ * 2       # B tiles
                        + ni * np_ * 4            # bias tiles
                        + mp * np_ * out_bytes),  # output write-back
    )

    out2d = pl.pallas_call(
        _lora_kernel,
        out_shape=jax.ShapeDtypeStruct((mp, np_), out_dtype),
        grid_spec=pltpu.PrefetchScalarGridSpec(
            num_scalar_prefetch=0,
            grid=grid,
            in_specs=[
                pl.BlockSpec((tm, tk), lambda i, j, k: (i, k)),   # x tile
                pl.BlockSpec((tk, tn), lambda i, j, k: (k, j)),   # Wt tile
                pl.BlockSpec((1, tn), lambda i, j, k: (0, j)),    # bias tile
                pl.BlockSpec((tm, rp), lambda i, j, k: (i, 0)),   # x @ A tile
                pl.BlockSpec((rp, tn), lambda i, j, k: (0, j)),   # B tile
            ],
            out_specs=pl.BlockSpec((tm, tn), lambda i, j, k: (i, j)),
            scratch_shapes=[pltpu.VMEM((tm, tn), jnp.float32)],   # f32 acc
        ),
        compiler_params=pltpu.CompilerParams(
            dimension_semantics=("parallel", "parallel", "arbitrary"),
            vmem_limit_bytes=params.vmem_limit),
        cost_estimate=cost,
    )(x_p, params.wt_p, params.bias_p, xa, params.b_p)

    out = out2d[:m, :out_features]
    return out.reshape(*lead_shape, out_features)


if __name__ == "__main__":
    # Small shapes implied by the module: Linear(in, out) wrapped by LoRA,
    # applied to a [batch, seq, hidden] activation.
    batch, seq = 2, 8
    in_features, out_features = 32, 32
    rank, alpha = 4, 8.0

    key = jax.random.PRNGKey(0)
    kx, kw, kb, ka, kbm = jax.random.split(key, 5)

    x = jax.random.normal(kx, (batch, seq, in_features), dtype=jnp.float32)

    # nn.Linear params: W.weight [out, in] -> passed transposed; W.bias [out].
    w = jax.random.normal(kw, (out_features, in_features), dtype=jnp.float32) * 0.1
    bias = jax.random.normal(kb, (out_features,), dtype=jnp.float32) * 0.1
    # A ~ Normal(0, 1) as in the module.  The module inits B = zeros; use a
    # random nonzero B here so the low-rank path is actually exercised.
    a_mat = jax.random.normal(ka, (in_features, rank), dtype=jnp.float32)
    b_mat = jax.random.normal(kbm, (rank, out_features), dtype=jnp.float32) * 0.1

    params = prepare_lora_params(w.T, bias, a_mat, b_mat, alpha=alpha, rank=rank)
    out = lora_forward(x, params)
    out = jax.block_until_ready(out)

    # Reference emulating the kernel's bf16-operand / f32-accumulate math.
    f32 = jnp.float32
    xb = x.astype(jnp.bfloat16).astype(f32)
    wtb = w.T.astype(jnp.bfloat16).astype(f32)
    ab = a_mat.astype(jnp.bfloat16).astype(f32)
    bb = (b_mat * (alpha / rank)).astype(jnp.bfloat16).astype(f32)
    xa_ref = (xb @ ab).astype(jnp.bfloat16).astype(f32)
    ref = xb @ wtb + bias + xa_ref @ bb

    assert out.shape == (batch, seq, out_features)
    assert jnp.allclose(out, ref, atol=1e-2, rtol=1e-2), "mismatch vs reference"

    print("KERNEL_OK")
</pallas_src>

<mosaic_0001>
module attributes {stable_mosaic.version = 11 : i64} {
  func.func @_lora_kernel(%arg0: i32, %arg1: i32, %arg2: i32, %arg3: memref<128x128xbf16, #tpu.memory_space<vmem>>, %arg4: memref<128x128xbf16, #tpu.memory_space<vmem>>, %arg5: memref<1x128xf32, #tpu.memory_space<vmem>>, %arg6: memref<128x128xbf16, #tpu.memory_space<vmem>>, %arg7: memref<128x128xbf16, #tpu.memory_space<vmem>>, %arg8: memref<128x128xf32, #tpu.memory_space<vmem>>, %arg9: memref<128x128xf32, #tpu.memory_space<vmem>>) attributes {dimension_semantics = [#tpu.dimension_semantics<parallel>, #tpu.dimension_semantics<parallel>, #tpu.dimension_semantics<arbitrary>], iteration_bounds = array<i64: 1, 1, 1>, scalar_prefetch = 0 : i64, scratch_operands = 1 : i64, tpu.core_type = #tpu.core_type<tc>, window_params = [{transform_indices = @transform_0, window_bounds = array<i64: 128, 128>}, {transform_indices = @transform_1, window_bounds = array<i64: 128, 128>}, {transform_indices = @transform_2, window_bounds = array<i64: 1, 128>}, {transform_indices = @transform_3, window_bounds = array<i64: 128, 128>}, {transform_indices = @transform_4, window_bounds = array<i64: 128, 128>}, {transform_indices = @transform_5, window_bounds = array<i64: 128, 128>}]} {
    %c0_i32 = arith.constant 0 : i32
    %0 = arith.cmpi eq, %arg2, %c0_i32 : i32
    %1 = arith.extui %0 : i1 to i32
    %c0_i32_0 = arith.constant 0 : i32
    %2 = arith.cmpi ne, %1, %c0_i32_0 : i32
    scf.if %2 {
      %cst_10 = arith.constant 0.000000e+00 : f32
      %12 = vector.broadcast %cst_10 : f32 to vector<128x128xf32>
      %c0_11 = arith.constant 0 : index
      %c0_12 = arith.constant 0 : index
      %13 = vector.load %arg9[%c0_11, %c0_12] : memref<128x128xf32, #tpu.memory_space<vmem>>, vector<128x128xf32>
      tpu.vector_store %arg9[%c0_11, %c0_12], %12 {strides = array<i32>} : memref<128x128xf32, #tpu.memory_space<vmem>>, vector<128x128xf32>,
    } else {
    }
    %c0 = arith.constant 0 : index
    %c0_1 = arith.constant 0 : index
    %3 = vector.load %arg9[%c0, %c0_1] : memref<128x128xf32, #tpu.memory_space<vmem>>, vector<128x128xf32>
    %c0_2 = arith.constant 0 : index
    %c0_3 = arith.constant 0 : index
    %4 = vector.load %arg3[%c0_2, %c0_3] : memref<128x128xbf16, #tpu.memory_space<vmem>>, vector<128x128xbf16>
    %c0_4 = arith.constant 0 : index
    %c0_5 = arith.constant 0 : index
    %5 = vector.load %arg4[%c0_4, %c0_5] : memref<128x128xbf16, #tpu.memory_space<vmem>>, vector<128x128xbf16>
    %cst = arith.constant dense<0.000000e+00> : vector<128x128xf32>
    %6 = tpu.matmul %4, %5, %cst {dimension_numbers = #tpu.dot_dimension_numbers<[1], [0], [0], [1], [0, 0, 1, 1], [], []>} : vector<128x128xbf16>, vector<128x128xbf16>, vector<128x128xf32> -> vector<128x128xf32>
    %7 = arith.addf %3, %6 : vector<128x128xf32>
    %c0_6 = arith.constant 0 : index
    %c0_7 = arith.constant 0 : index
    %8 = vector.load %arg9[%c0_6, %c0_7] : memref<128x128xf32, #tpu.memory_space<vmem>>, vector<128x128xf32>
    tpu.vector_store %arg9[%c0_6, %c0_7], %7 {strides = array<i32>} : memref<128x128xf32, #tpu.memory_space<vmem>>, vector<128x128xf32>,
    %c0_i32_8 = arith.constant 0 : i32
    %9 = arith.cmpi eq, %arg2, %c0_i32_8 : i32
    %10 = arith.extui %9 : i1 to i32
    %c0_i32_9 = arith.constant 0 : i32
    %11 = arith.cmpi ne, %10, %c0_i32_9 : i32
    scf.if %11 {
      %c0_10 = arith.constant 0 : index
      %c0_11 = arith.constant 0 : index
      %12 = vector.load %arg6[%c0_10, %c0_11] : memref<128x128xbf16, #tpu.memory_space<vmem>>, vector<128x128xbf16>
      %c0_12 = arith.constant 0 : index
      %c0_13 = arith.constant 0 : index
      %13 = vector.load %arg7[%c0_12, %c0_13] : memref<128x128xbf16, #tpu.memory_space<vmem>>, vector<128x128xbf16>
      %cst_14 = arith.constant dense<0.000000e+00> : vector<128x128xf32>
      %14 = tpu.matmul %12, %13, %cst_14 {dimension_numbers = #tpu.dot_dimension_numbers<[1], [0], [0], [1], [0, 0, 1, 1], [], []>} : vector<128x128xbf16>, vector<128x128xbf16>, vector<128x128xf32> -> vector<128x128xf32>
      %c0_15 = arith.constant 0 : index
      %c0_16 = arith.constant 0 : index
      %15 = vector.load %arg9[%c0_15, %c0_16] : memref<128x128xf32, #tpu.memory_space<vmem>>, vector<128x128xf32>
      %c0_17 = arith.constant 0 : index
      %c0_18 = arith.constant 0 : index
      %16 = vector.load %arg5[%c0_17, %c0_18] : memref<1x128xf32, #tpu.memory_space<vmem>>, vector<1x128xf32>
      %17 = vector.broadcast %16 : vector<1x128xf32> to vector<128x128xf32>
      %18 = arith.addf %15, %17 : vector<128x128xf32>
      %19 = arith.addf %18, %14 : vector<128x128xf32>
      %c0_19 = arith.constant 0 : index
      %c0_20 = arith.constant 0 : index
      %20 = vector.load %arg8[%c0_19, %c0_20] : memref<128x128xf32, #tpu.memory_space<vmem>>, vector<128x128xf32>
      tpu.vector_store %arg8[%c0_19, %c0_20], %19 {strides = array<i32>} : memref<128x128xf32, #tpu.memory_space<vmem>>, vector<128x128xf32>,
    } else {
    }
    return
  }
  func.func @transform_0(%arg0: i32, %arg1: i32, %arg2: i32) -> (i32, i32) {
    %c0_i32 = arith.constant 0 : i32
    return %arg0, %arg2 : i32, i32
  }
  func.func @transform_1(%arg0: i32, %arg1: i32, %arg2: i32) -> (i32, i32) {
    %c0_i32 = arith.constant 0 : i32
    return %arg2, %arg1 : i32, i32
  }
  func.func @transform_2(%arg0: i32, %arg1: i32, %arg2: i32) -> (i32, i32) {
    %c0_i32 = arith.constant 0 : i32
    %c0_i32_0 = arith.constant 0 : i32
    return %c0_i32, %arg1 : i32, i32
  }
  func.func @transform_3(%arg0: i32, %arg1: i32, %arg2: i32) -> (i32, i32) {
    %c0_i32 = arith.constant 0 : i32
    %c0_i32_0 = arith.constant 0 : i32
    return %arg0, %c0_i32 : i32, i32
  }
  func.func @transform_4(%arg0: i32, %arg1: i32, %arg2: i32) -> (i32, i32) {
    %c0_i32 = arith.constant 0 : i32
    %c0_i32_0 = arith.constant 0 : i32
    return %c0_i32, %arg1 : i32, i32
  }
  func.func @transform_5(%arg0: i32, %arg1: i32, %arg2: i32) -> (i32, i32) {
    %c0_i32 = arith.constant 0 : i32
    return %arg0, %arg1 : i32, i32
  }
}

</mosaic_0001>

<llo_original>
// kernel: tpu_custom_call.1
$region0: #{tpu_custom_call.1}
  #allocation0 [shape = 'u32[]', space=smem, size = 0x4, offset = 0x4, fixed_abs, tag = 'smem constant byte address 0x4 - core index']
  #allocation1 [shape = 'u32[144,128]{1,0:T(1,128)}', space=vmem, size = 0x12000, scoped, tag = 'internal scratch']
  #allocation2 [shape = 'f32[128,128]{1,0:T(8,128)}', space=vmem, size = 0x10000, scoped, tag = 'scratch operand']
  %s0 = inlined_call_operand.hbm [shape: bf16[128,128], index: 0, kind: input, shape index: {}]
  %s1 = inlined_call_operand.hbm [shape: bf16[128,128], index: 1, kind: input, shape index: {}]
  %s2 = inlined_call_operand.vmem [shape: f32[1,128], index: 2, kind: input, shape index: {}]
  %s3 = inlined_call_operand.hbm [shape: bf16[128,128], index: 3, kind: input, shape index: {}]
  %s4 = inlined_call_operand.hbm [shape: bf16[128,128], index: 4, kind: input, shape index: {}]
  %s5 = inlined_call_operand.hbm [shape: f32[128,128], index: 5, kind: output, shape index: {}]
  %s6 = sld [smem:[#allocation0]]
  $region54: #{tpu_custom_call.1} parent=0
    _
  %s8 = ssub.s32 1, %s6
  %s9 = scalar_select 0, %s8, %s6
  $region1: #{tpu_custom_call.1} parent=0
    #allocation3 [shape = 'u8[32768]{0}', space=vmem, size = 0x8000, scoped, tag = 'input window, operand 0, single buffered']
    #allocation4 [shape = 's32[1]{0}', space=sflag, size = 0x4, scoped, tag = 'scoped memory for tpu_custom_call.1']
    #allocation5 [shape = 's32[1]{0}', space=sflag, size = 0x4, scoped, tag = 'scoped memory for tpu_custom_call.1']
    #allocation6 [shape = 'u8[32768]{0}', space=vmem, size = 0x8000, scoped, tag = 'input window, operand 1, single buffered']
    #allocation7 [shape = 's32[1]{0}', space=sflag, size = 0x4, scoped, tag = 'scoped memory for tpu_custom_call.1']
    #allocation8 [shape = 'u8[32768]{0}', space=vmem, size = 0x8000, scoped, tag = 'input window, operand 3, single buffered']
    #allocation9 [shape = 'u8[32768]{0}', space=vmem, size = 0x8000, scoped, tag = 'input window, operand 4, single buffered']
    #allocation10 [shape = 's32[1]{0}', space=sflag, size = 0x4, scoped, tag = 'scoped memory for tpu_custom_call.1']
    #allocation11 [shape = 'u8[65536]{0}', space=vmem, size = 0x10000, scoped, tag = 'output window, operand 0, single buffered']
    %10 = vsyncpa [#allocation4], 0
    %11 = vsyncpa [#allocation7], 0
    %12 = vsyncpa [#allocation10], 0
    %13 = vsyncpa [#allocation5], 0
    // Predicated region
    $region2: #{tpu_custom_call.1} parent=1 // pred_check
      _
    $region3: #{tpu_custom_call.1} parent=1 // pred_check_branch
      %15 = sbr.rel (0) target = $region5
    $region4: #{tpu_custom_call.1} parent=1 // pred_region
      %s17 = ssub.s32 1024, 1024
      %18 = vsyncadd [#allocation4], %s17
      %s19 = sshll.u32 [#allocation3], 4
      %s20 = int_to_ptr.vmem [resolvable:$true] %s19
      %25 = dma.hbm_to_vmem [thread:$0]  %s0, 1024, %s20, [#allocation4], 64, 64, 4
    $region5: #{tpu_custom_call.1} parent=1 // pred_fallthru
      _
    // Predicated region
    $region6: #{tpu_custom_call.1} parent=1 // pred_check
      _
    $region7: #{tpu_custom_call.1} parent=1 // pred_check_branch
      %27 = sbr.rel (0) target = $region9
    $region8: #{tpu_custom_call.1} parent=1 // pred_region
      %s29 = ssub.s32 1024, 1024
      %30 = vsyncadd [#allocation7], %s29
      %s31 = sshll.u32 [#allocation6], 4
      %s32 = int_to_ptr.vmem [resolvable:$true] %s31
      %37 = dma.hbm_to_vmem [thread:$0]  %s1, 1024, %s32, [#allocation7], 64, 64, 4
    $region9: #{tpu_custom_call.1} parent=1 // pred_fallthru
      _
    // Predicated region
    $region10: #{tpu_custom_call.1} parent=1 // pred_check
      _
    $region11: #{tpu_custom_call.1} parent=1 // pred_check_branch
      %39 = sbr.rel (0) target = $region13
    $region12: #{tpu_custom_call.1} parent=1 // pred_region
      _
    $region13: #{tpu_custom_call.1} parent=1 // pred_fallthru
      _
    // Predicated region
    $region14: #{tpu_custom_call.1} parent=1 // pred_check
      _
    $region15: #{tpu_custom_call.1} parent=1 // pred_check_branch
      %41 = sbr.rel (0) target = $region17
    $region16: #{tpu_custom_call.1} parent=1 // pred_region
      %s43 = ssub.s32 1024, 1024
      %44 = vsyncadd [#allocation7], %s43
      %s45 = sshll.u32 [#allocation8], 4
      %s46 = int_to_ptr.vmem [resolvable:$true] %s45
      %51 = dma.hbm_to_vmem [thread:$0]  %s3, 1024, %s46, [#allocation7], 64, 64, 4
    $region17: #{tpu_custom_call.1} parent=1 // pred_fallthru
      _
    // Predicated region
    $region18: #{tpu_custom_call.1} parent=1 // pred_check
      _
    $region19: #{tpu_custom_call.1} parent=1 // pred_check_branch
      %53 = sbr.rel (0) target = $region21
    $region20: #{tpu_custom_call.1} parent=1 // pred_region
      %s55 = ssub.s32 1024, 1024
      %56 = vsyncadd [#allocation10], %s55
      %s57 = sshll.u32 [#allocation9], 4
      %s58 = int_to_ptr.vmem [resolvable:$true] %s57
      %63 = dma.hbm_to_vmem [thread:$0]  %s4, 1024, %s58, [#allocation10], 64, 64, 4
    $region21: #{tpu_custom_call.1} parent=1 // pred_fallthru
      _
    // Predicated region
    $region22: #{tpu_custom_call.1} parent=1 // pred_check
      _
    $region23: #{tpu_custom_call.1} parent=1 // pred_check_branch
      %65 = sbr.rel (0) target = $region25
    $region24: #{tpu_custom_call.1} parent=1 // pred_region
      %66 = dma.done [#allocation4], 1024
    $region25: #{tpu_custom_call.1} parent=1 // pred_fallthru
      _
    // Predicated region
    $region26: #{tpu_custom_call.1} parent=1 // pred_check
      _
    $region27: #{tpu_custom_call.1} parent=1 // pred_check_branch
      %68 = sbr.rel (0) target = $region29
    $region28: #{tpu_custom_call.1} parent=1 // pred_region
      %69 = dma.done [#allocation7], 1024
    $region29: #{tpu_custom_call.1} parent=1 // pred_fallthru
      _
    // Predicated region
    $region30: #{tpu_custom_call.1} parent=1 // pred_check
      _
    $region31: #{tpu_custom_call.1} parent=1 // pred_check_branch
      %71 = sbr.rel (0) target = $region33
    $region32: #{tpu_custom_call.1} parent=1 // pred_region
      %72 = dma.done [#allocation7], 1024
    $region33: #{tpu_custom_call.1} parent=1 // pred_fallthru
      _
    // Predicated region
    $region34: #{tpu_custom_call.1} parent=1 // pred_check
      _
    $region35: #{tpu_custom_call.1} parent=1 // pred_check_branch
      %74 = sbr.rel (0) target = $region37
    $region36: #{tpu_custom_call.1} parent=1 // pred_region
      %75 = dma.done [#allocation10], 1024
    $region37: #{tpu_custom_call.1} parent=1 // pred_fallthru
      _
    %p77 = scmp.eq.s32.totalorder 0, 0
    // Predicated region
    $region38: #{tpu_custom_call.1} parent=1 // pred_check
      %p78 = pneg %p77
    $region39: #{tpu_custom_call.1} parent=1 // pred_check_branch
      %80 = sbr.rel (%p78) target = $region41
    $region40: #{tpu_custom_call.1} parent=1 // pred_region
      %81 = vst [vmem:[#allocation2] sm:$0xff] 0.0
      %82 = vst [vmem:[#allocation2 + $0x8] sm:$0xff] 0.0
      %83 = vst [vmem:[#allocation2 + $0x10] sm:$0xff] 0.0
      %84 = vst [vmem:[#allocation2 + $0x18] sm:$0xff] 0.0
      %85 = vst [vmem:[#allocation2 + $0x20] sm:$0xff] 0.0
      %86 = vst [vmem:[#allocation2 + $0x28] sm:$0xff] 0.0
      %87 = vst [vmem:[#allocation2 + $0x30] sm:$0xff] 0.0
      %88 = vst [vmem:[#allocation2 + $0x38] sm:$0xff] 0.0
      %89 = vst [vmem:[#allocation2 + $0x40] sm:$0xff] 0.0
      %90 = vst [vmem:[#allocation2 + $0x48] sm:$0xff] 0.0
      %91 = vst [vmem:[#allocation2 + $0x50] sm:$0xff] 0.0
      %92 = vst [vmem:[#allocation2 + $0x58] sm:$0xff] 0.0
      %93 = vst [vmem:[#allocation2 + $0x60] sm:$0xff] 0.0
      %94 = vst [vmem:[#allocation2 + $0x68] sm:$0xff] 0.0
      %95 = vst [vmem:[#allocation2 + $0x70] sm:$0xff] 0.0
      %96 = vst [vmem:[#allocation2 + $0x78] sm:$0xff] 0.0
    $region41: #{tpu_custom_call.1} parent=1 // pred_fallthru
      _
    %v97 = vld [vmem:[#allocation2] sm:$0xff]
    %v98 = vld [vmem:[#allocation2 + $0x8] sm:$0xff]
    %v99 = vld [vmem:[#allocation2 + $0x10] sm:$0xff]
    %v100 = vld [vmem:[#allocation2 + $0x18] sm:$0xff]
    %v101 = vld [vmem:[#allocation2 + $0x20] sm:$0xff]
    %v102 = vld [vmem:[#allocation2 + $0x28] sm:$0xff]
    %v103 = vld [vmem:[#allocation2 + $0x30] sm:$0xff]
    %v104 = vld [vmem:[#allocation2 + $0x38] sm:$0xff]
    %v105 = vld [vmem:[#allocation2 + $0x40] sm:$0xff]
    %v106 = vld [vmem:[#allocation2 + $0x48] sm:$0xff]
    %v107 = vld [vmem:[#allocation2 + $0x50] sm:$0xff]
    %v108 = vld [vmem:[#allocation2 + $0x58] sm:$0xff]
    %v109 = vld [vmem:[#allocation2 + $0x60] sm:$0xff]
    %v110 = vld [vmem:[#allocation2 + $0x68] sm:$0xff]
    %v111 = vld [vmem:[#allocation2 + $0x70] sm:$0xff]
    %v112 = vld [vmem:[#allocation2 + $0x78] sm:$0xff]
    %v113 = vld [vmem:[#allocation3] sm:$0xf]
    %v114 = vld [vmem:[#allocation3 + $0x4] sm:$0xf]
    %v115 = vld [vmem:[#allocation3 + $0x8] sm:$0xf]
    %v116 = vld [vmem:[#allocation3 + $0xc] sm:$0xf]
    %v117 = vld [vmem:[#allocation3 + $0x10] sm:$0xf]
    %v118 = vld [vmem:[#allocation3 + $0x14] sm:$0xf]
    %v119 = vld [vmem:[#allocation3 + $0x18] sm:$0xf]
    %v120 = vld [vmem:[#allocation3 + $0x1c] sm:$0xf]
    %v121 = vld [vmem:[#allocation3 + $0x20] sm:$0xf]
    %v122 = vld [vmem:[#allocation3 + $0x24] sm:$0xf]
    %v123 = vld [vmem:[#allocation3 + $0x28] sm:$0xf]
    %v124 = vld [vmem:[#allocation3 + $0x2c] sm:$0xf]
    %v125 = vld [vmem:[#allocation3 + $0x30] sm:$0xf]
    %v126 = vld [vmem:[#allocation3 + $0x34] sm:$0xf]
    %v127 = vld [vmem:[#allocation3 + $0x38] sm:$0xf]
    %v128 = vld [vmem:[#allocation3 + $0x3c] sm:$0xf]
    %v129 = vld [vmem:[#allocation6] sm:$0xf]
    %v130 = vld [vmem:[#allocation6 + $0x4] sm:$0xf]
    %v131 = vld [vmem:[#allocation6 + $0x8] sm:$0xf]
    %v132 = vld [vmem:[#allocation6 + $0xc] sm:$0xf]
    %v133 = vld [vmem:[#allocation6 + $0x10] sm:$0xf]
    %v134 = vld [vmem:[#allocation6 + $0x14] sm:$0xf]
    %v135 = vld [vmem:[#allocation6 + $0x18] sm:$0xf]
    %v136 = vld [vmem:[#allocation6 + $0x1c] sm:$0xf]
    %v137 = vld [vmem:[#allocation6 + $0x20] sm:$0xf]
    %v138 = vld [vmem:[#allocation6 + $0x24] sm:$0xf]
    %v139 = vld [vmem:[#allocation6 + $0x28] sm:$0xf]
    %v140 = vld [vmem:[#allocation6 + $0x2c] sm:$0xf]
    %v141 = vld [vmem:[#allocation6 + $0x30] sm:$0xf]
    %v142 = vld [vmem:[#allocation6 + $0x34] sm:$0xf]
    %v143 = vld [vmem:[#allocation6 + $0x38] sm:$0xf]
    %v144 = vld [vmem:[#allocation6 + $0x3c] sm:$0xf]
    %v161 = vunpack.c.l.b16 %v113
    %v162 = vunpack.c.l.b16 %v114
    %v163 = vunpack.c.l.b16 %v115
    %v164 = vunpack.c.l.b16 %v116
    %v165 = vunpack.c.l.b16 %v117
    %v166 = vunpack.c.l.b16 %v118
    %v167 = vunpack.c.l.b16 %v119
    %v168 = vunpack.c.l.b16 %v120
    %v169 = vunpack.c.l.b16 %v121
    %v170 = vunpack.c.l.b16 %v122
    %v171 = vunpack.c.l.b16 %v123
    %v172 = vunpack.c.l.b16 %v124
    %v173 = vunpack.c.l.b16 %v125
    %v174 = vunpack.c.l.b16 %v126
    %v175 = vunpack.c.l.b16 %v127
    %v176 = vunpack.c.l.b16 %v128
    %v177 = vpack.c.b16 %v162, %v161
    %v178 = vpack.c.b16 %v164, %v163
    %v179 = vpack.c.b16 %v166, %v165
    %v180 = vpack.c.b16 %v168, %v167
    %v181 = vpack.c.b16 %v170, %v169
    %v182 = vpack.c.b16 %v172, %v171
    %v183 = vpack.c.b16 %v174, %v173
    %v184 = vpack.c.b16 %v176, %v175
    %v209 = vunpack.c.l.b16 %v129
    %v210 = vunpack.c.l.b16 %v130
    %v211 = vunpack.c.l.b16 %v131
    %v212 = vunpack.c.l.b16 %v132
    %v213 = vunpack.c.l.b16 %v133
    %v214 = vunpack.c.l.b16 %v134
    %v215 = vunpack.c.l.b16 %v135
    %v216 = vunpack.c.l.b16 %v136
    %v217 = vunpack.c.l.b16 %v137
    %v218 = vunpack.c.l.b16 %v138
    %v219 = vunpack.c.l.b16 %v139
    %v220 = vunpack.c.l.b16 %v140
    %v221 = vunpack.c.l.b16 %v141
    %v222 = vunpack.c.l.b16 %v142
    %v223 = vunpack.c.l.b16 %v143
    %v224 = vunpack.c.l.b16 %v144
    %v225 = vpack.c.b16 %v210, %v209
    %v226 = vpack.c.b16 %v212, %v211
    %v227 = vpack.c.b16 %v214, %v213
    %v228 = vpack.c.b16 %v216, %v215
    %v229 = vpack.c.b16 %v218, %v217
    %v230 = vpack.c.b16 %v220, %v219
    %v231 = vpack.c.b16 %v222, %v221
    %v232 = vpack.c.b16 %v224, %v223
    %241 = vmatprep.subr.bf16.mxu0 0
    %242 = vmatpush1.bf16.msra.mxu0 %v225
    %243 = vmatprep.subr.bf16.mxu0 0
    %244 = vmatpush1.bf16.msra.mxu0 %v226
    %245 = vmatprep.subr.bf16.mxu0 0
    %246 = vmatpush1.bf16.msra.mxu0 %v227
    %247 = vmatprep.subr.bf16.mxu0 0
    %248 = vmatpush1.bf16.msra.mxu0 %v228
    %249 = vmatprep.subr.bf16.mxu0 0
    %250 = vmatpush1.bf16.msra.mxu0 %v229
    %251 = vmatprep.subr.bf16.mxu0 0
    %252 = vmatpush1.bf16.msra.mxu0 %v230
    %253 = vmatprep.subr.bf16.mxu0 0
    %254 = vmatpush1.bf16.msra.mxu0 %v231
    %255 = vmatprep.subr.bf16.mxu0 0
    %256 = vmatpush1.bf16.msra.mxu0 %v232
    %257 = vmatprep.subr.bf16.mxu0 0
    %258 = vmatpush1.bf16.msra.mxu0 0
    %259 = vmatprep.subr.bf16.mxu0 0
    %260 = vmatpush1.bf16.msra.mxu0 0
    %261 = vmatprep.subr.bf16.mxu0 0
    %262 = vmatpush1.bf16.msra.mxu0 0
    %263 = vmatprep.subr.bf16.mxu0 0
    %264 = vmatpush1.bf16.msra.mxu0 0
    %265 = vmatprep.subr.bf16.mxu0 0
    %266 = vmatpush1.bf16.msra.mxu0 0
    %267 = vmatprep.subr.bf16.mxu0 0
    %268 = vmatpush1.bf16.msra.mxu0 0
    %269 = vmatprep.subr.bf16.mxu0 0
    %270 = vmatpush1.bf16.msra.mxu0 0
    %271 = vmatprep.subr.bf16.mxu0 0
    %272 = vmatpush1.bf16.msra.mxu0 0
    %273 = vmatprep.mubr.bf16.mxu0 0
    %274 = vmatmul.mubr.bf16.gmra.mrb[0].mxu0 %v177
    %v275 = vpop.f32.mrb[0].mxu0
    %v276 = vadd.f32 0.0, %v275
    %v277 = vpop.f32.mrb[0].mxu0
    %v278 = vpop.f32.mrb[0].mxu0
    %v279 = vadd.f32 0.0, %v278
    %v280 = vpop.f32.mrb[0].mxu0
    %281 = vmatprep.mubr.bf16.mxu0 0
    %282 = vmatmul.mubr.bf16.gmra.mrb[0].mxu0 %v178
    %v283 = vpop.f32.mrb[0].mxu0
    %v284 = vadd.f32 0.0, %v283
    %v285 = vpop.f32.mrb[0].mxu0
    %v286 = vpop.f32.mrb[0].mxu0
    %v287 = vadd.f32 0.0, %v286
    %v288 = vpop.f32.mrb[0].mxu0
    %289 = vmatprep.mubr.bf16.mxu0 0
    %290 = vmatmul.mubr.bf16.gmra.mrb[0].mxu0 %v179
    %v291 = vpop.f32.mrb[0].mxu0
    %v292 = vadd.f32 0.0, %v291
    %v293 = vpop.f32.mrb[0].mxu0
    %v294 = vpop.f32.mrb[0].mxu0
    %v295 = vadd.f32 0.0, %v294
    %v296 = vpop.f32.mrb[0].mxu0
    %297 = vmatprep.mubr.bf16.mxu0 0
    %298 = vmatmul.mubr.bf16.gmra.mrb[0].mxu0 %v180
    %v299 = vpop.f32.mrb[0].mxu0
    %v300 = vadd.f32 0.0, %v299
    %v301 = vpop.f32.mrb[0].mxu0
    %v302 = vpop.f32.mrb[0].mxu0
    %v303 = vadd.f32 0.0, %v302
    %v304 = vpop.f32.mrb[0].mxu0
    %305 = vmatprep.mubr.bf16.mxu0 0
    %306 = vmatmul.mubr.bf16.gmra.mrb[0].mxu0 %v181
    %v307 = vpop.f32.mrb[0].mxu0
    %v308 = vadd.f32 0.0, %v307
    %v309 = vpop.f32.mrb[0].mxu0
    %v310 = vpop.f32.mrb[0].mxu0
    %v311 = vadd.f32 0.0, %v310
    %v312 = vpop.f32.mrb[0].mxu0
    %313 = vmatprep.mubr.bf16.mxu0 0
    %314 = vmatmul.mubr.bf16.gmra.mrb[0].mxu0 %v182
    %v315 = vpop.f32.mrb[0].mxu0
    %v316 = vadd.f32 0.0, %v315
    %v317 = vpop.f32.mrb[0].mxu0
    %v318 = vpop.f32.mrb[0].mxu0
    %v319 = vadd.f32 0.0, %v318
    %v320 = vpop.f32.mrb[0].mxu0
    %321 = vmatprep.mubr.bf16.mxu0 0
    %322 = vmatmul.mubr.bf16.gmra.mrb[0].mxu0 %v183
    %v323 = vpop.f32.mrb[0].mxu0
    %v324 = vadd.f32 0.0, %v323
    %v325 = vpop.f32.mrb[0].mxu0
    %v326 = vpop.f32.mrb[0].mxu0
    %v327 = vadd.f32 0.0, %v326
    %v328 = vpop.f32.mrb[0].mxu0
    %329 = vmatprep.mubr.bf16.mxu0 0
    %330 = vmatmul.mubr.bf16.gmra.mrb[0].mxu0 %v184
    %v331 = vpop.f32.mrb[0].mxu0
    %v332 = vadd.f32 0.0, %v331
    %v333 = vpop.f32.mrb[0].mxu0
    %v334 = vpop.f32.mrb[0].mxu0
    %v335 = vadd.f32 0.0, %v334
    %v336 = vpop.f32.mrb[0].mxu0
    %337 = vdwg.mxu0
    %v338 = vadd.f32 %v97, %v276
    %v339 = vadd.f32 %v98, %v279
    %v340 = vadd.f32 %v99, %v284
    %v341 = vadd.f32 %v100, %v287
    %v342 = vadd.f32 %v101, %v292
    %v343 = vadd.f32 %v102, %v295
    %v344 = vadd.f32 %v103, %v300
    %v345 = vadd.f32 %v104, %v303
    %v346 = vadd.f32 %v105, %v308
    %v347 = vadd.f32 %v106, %v311
    %v348 = vadd.f32 %v107, %v316
    %v349 = vadd.f32 %v108, %v319
    %v350 = vadd.f32 %v109, %v324
    %v351 = vadd.f32 %v110, %v327
    %v352 = vadd.f32 %v111, %v332
    %v353 = vadd.f32 %v112, %v335
    %354 = vst [vmem:[#allocation2] sm:$0xff] %v338
    %355 = vst [vmem:[#allocation2 + $0x8] sm:$0xff] %v339
    %356 = vst [vmem:[#allocation2 + $0x10] sm:$0xff] %v340
    %357 = vst [vmem:[#allocation2 + $0x18] sm:$0xff] %v341
    %358 = vst [vmem:[#allocation2 + $0x20] sm:$0xff] %v342
    %359 = vst [vmem:[#allocation2 + $0x28] sm:$0xff] %v343
    %360 = vst [vmem:[#allocation2 + $0x30] sm:$0xff] %v344
    %361 = vst [vmem:[#allocation2 + $0x38] sm:$0xff] %v345
    %362 = vst [vmem:[#allocation2 + $0x40] sm:$0xff] %v346
    %363 = vst [vmem:[#allocation2 + $0x48] sm:$0xff] %v347
    %364 = vst [vmem:[#allocation2 + $0x50] sm:$0xff] %v348
    %365 = vst [vmem:[#allocation2 + $0x58] sm:$0xff] %v349
    %366 = vst [vmem:[#allocation2 + $0x60] sm:$0xff] %v350
    %367 = vst [vmem:[#allocation2 + $0x68] sm:$0xff] %v351
    %368 = vst [vmem:[#allocation2 + $0x70] sm:$0xff] %v352
    %369 = vst [vmem:[#allocation2 + $0x78] sm:$0xff] %v353
    // Predicated region
    $region42: #{tpu_custom_call.1} parent=1 // pred_check
      %p370 = pneg %p77
    $region43: #{tpu_custom_call.1} parent=1 // pred_check_branch
      %372 = sbr.rel (%p370) target = $region45
    $region44: #{tpu_custom_call.1} parent=1 // pred_region
      %v373 = vld [vmem:[#allocation8] sm:$0xf]
      %v374 = vld [vmem:[#allocation8 + $0x4] sm:$0xf]
      %v375 = vld [vmem:[#allocation8 + $0x8] sm:$0xf]
      %v376 = vld [vmem:[#allocation8 + $0xc] sm:$0xf]
      %v377 = vld [vmem:[#allocation8 + $0x10] sm:$0xf]
      %v378 = vld [vmem:[#allocation8 + $0x14] sm:$0xf]
      %v379 = vld [vmem:[#allocation8 + $0x18] sm:$0xf]
      %v380 = vld [vmem:[#allocation8 + $0x1c] sm:$0xf]
      %v381 = vld [vmem:[#allocation8 + $0x20] sm:$0xf]
      %v382 = vld [vmem:[#allocation8 + $0x24] sm:$0xf]
      %v383 = vld [vmem:[#allocation8 + $0x28] sm:$0xf]
      %v384 = vld [vmem:[#allocation8 + $0x2c] sm:$0xf]
      %v385 = vld [vmem:[#allocation8 + $0x30] sm:$0xf]
      %v386 = vld [vmem:[#allocation8 + $0x34] sm:$0xf]
      %v387 = vld [vmem:[#allocation8 + $0x38] sm:$0xf]
      %v388 = vld [vmem:[#allocation8 + $0x3c] sm:$0xf]
      %v389 = vld [vmem:[#allocation9] sm:$0xf]
      %v390 = vld [vmem:[#allocation9 + $0x4] sm:$0xf]
      %v391 = vld [vmem:[#allocation9 + $0x8] sm:$0xf]
      %v392 = vld [vmem:[#allocation9 + $0xc] sm:$0xf]
      %v393 = vld [vmem:[#allocation9 + $0x10] sm:$0xf]
      %v394 = vld [vmem:[#allocation9 + $0x14] sm:$0xf]
      %v395 = vld [vmem:[#allocation9 + $0x18] sm:$0xf]
      %v396 = vld [vmem:[#allocation9 + $0x1c] sm:$0xf]
      %v397 = vld [vmem:[#allocation9 + $0x20] sm:$0xf]
      %v398 = vld [vmem:[#allocation9 + $0x24] sm:$0xf]
      %v399 = vld [vmem:[#allocation9 + $0x28] sm:$0xf]
      %v400 = vld [vmem:[#allocation9 + $0x2c] sm:$0xf]
      %v401 = vld [vmem:[#allocation9 + $0x30] sm:$0xf]
      %v402 = vld [vmem:[#allocation9 + $0x34] sm:$0xf]
      %v403 = vld [vmem:[#allocation9 + $0x38] sm:$0xf]
      %v404 = vld [vmem:[#allocation9 + $0x3c] sm:$0xf]
      %v421 = vunpack.c.l.b16 %v373
      %v422 = vunpack.c.l.b16 %v374
      %v423 = vunpack.c.l.b16 %v375
      %v424 = vunpack.c.l.b16 %v376
      %v425 = vunpack.c.l.b16 %v377
      %v426 = vunpack.c.l.b16 %v378
      %v427 = vunpack.c.l.b16 %v379
      %v428 = vunpack.c.l.b16 %v380
      %v429 = vunpack.c.l.b16 %v381
      %v430 = vunpack.c.l.b16 %v382
      %v431 = vunpack.c.l.b16 %v383
      %v432 = vunpack.c.l.b16 %v384
      %v433 = vunpack.c.l.b16 %v385
      %v434 = vunpack.c.l.b16 %v386
      %v435 = vunpack.c.l.b16 %v387
      %v436 = vunpack.c.l.b16 %v388
      %v437 = vpack.c.b16 %v422, %v421
      %v438 = vpack.c.b16 %v424, %v423
      %v439 = vpack.c.b16 %v426, %v425
      %v440 = vpack.c.b16 %v428, %v427
      %v441 = vpack.c.b16 %v430, %v429
      %v442 = vpack.c.b16 %v432, %v431
      %v443 = vpack.c.b16 %v434, %v433
      %v444 = vpack.c.b16 %v436, %v435
      %v469 = vunpack.c.l.b16 %v389
      %v470 = vunpack.c.l.b16 %v390
      %v471 = vunpack.c.l.b16 %v391
      %v472 = vunpack.c.l.b16 %v392
      %v473 = vunpack.c.l.b16 %v393
      %v474 = vunpack.c.l.b16 %v394
      %v475 = vunpack.c.l.b16 %v395
      %v476 = vunpack.c.l.b16 %v396
      %v477 = vunpack.c.l.b16 %v397
      %v478 = vunpack.c.l.b16 %v398
      %v479 = vunpack.c.l.b16 %v399
      %v480 = vunpack.c.l.b16 %v400
      %v481 = vunpack.c.l.b16 %v401
      %v482 = vunpack.c.l.b16 %v402
      %v483 = vunpack.c.l.b16 %v403
      %v484 = vunpack.c.l.b16 %v404
      %v485 = vpack.c.b16 %v470, %v469
      %v486 = vpack.c.b16 %v472, %v471
      %v487 = vpack.c.b16 %v474, %v473
      %v488 = vpack.c.b16 %v476, %v475
      %v489 = vpack.c.b16 %v478, %v477
      %v490 = vpack.c.b16 %v480, %v479
      %v491 = vpack.c.b16 %v482, %v481
      %v492 = vpack.c.b16 %v484, %v483
      %501 = vmatprep.subr.bf16.mxu0 0
      %502 = vmatpush1.bf16.msra.mxu0 %v485
      %503 = vmatprep.subr.bf16.mxu0 0
      %504 = vmatpush1.bf16.msra.mxu0 %v486
      %505 = vmatprep.subr.bf16.mxu0 0
      %506 = vmatpush1.bf16.msra.mxu0 %v487
      %507 = vmatprep.subr.bf16.mxu0 0
      %508 = vmatpush1.bf16.msra.mxu0 %v488
      %509 = vmatprep.subr.bf16.mxu0 0
      %510 = vmatpush1.bf16.msra.mxu0 %v489
      %511 = vmatprep.subr.bf16.mxu0 0
      %512 = vmatpush1.bf16.msra.mxu0 %v490
      %513 = vmatprep.subr.bf16.mxu0 0
      %514 = vmatpush1.bf16.msra.mxu0 %v491
      %515 = vmatprep.subr.bf16.mxu0 0
      %516 = vmatpush1.bf16.msra.mxu0 %v492
      %517 = vmatprep.subr.bf16.mxu0 0
      %518 = vmatpush1.bf16.msra.mxu0 0
      %519 = vmatprep.subr.bf16.mxu0 0
      %520 = vmatpush1.bf16.msra.mxu0 0
      %521 = vmatprep.subr.bf16.mxu0 0
      %522 = vmatpush1.bf16.msra.mxu0 0
      %523 = vmatprep.subr.bf16.mxu0 0
      %524 = vmatpush1.bf16.msra.mxu0 0
      %525 = vmatprep.subr.bf16.mxu0 0
      %526 = vmatpush1.bf16.msra.mxu0 0
      %527 = vmatprep.subr.bf16.mxu0 0
      %528 = vmatpush1.bf16.msra.mxu0 0
      %529 = vmatprep.subr.bf16.mxu0 0
      %530 = vmatpush1.bf16.msra.mxu0 0
      %531 = vmatprep.subr.bf16.mxu0 0
      %532 = vmatpush1.bf16.msra.mxu0 0
      %533 = vmatprep.mubr.bf16.mxu0 0
      %534 = vmatmul.mubr.bf16.gmra.mrb[0].mxu0 %v437
      %v535 = vpop.f32.mrb[0].mxu0
      %v536 = vadd.f32 0.0, %v535
      %v537 = vpop.f32.mrb[0].mxu0
      %v538 = vpop.f32.mrb[0].mxu0
      %v539 = vadd.f32 0.0, %v538
      %v540 = vpop.f32.mrb[0].mxu0
      %541 = vmatprep.mubr.bf16.mxu0 0
      %542 = vmatmul.mubr.bf16.gmra.mrb[0].mxu0 %v438
      %v543 = vpop.f32.mrb[0].mxu0
      %v544 = vadd.f32 0.0, %v543
      %v545 = vpop.f32.mrb[0].mxu0
      %v546 = vpop.f32.mrb[0].mxu0
      %v547 = vadd.f32 0.0, %v546
      %v548 = vpop.f32.mrb[0].mxu0
      %549 = vmatprep.mubr.bf16.mxu0 0
      %550 = vmatmul.mubr.bf16.gmra.mrb[0].mxu0 %v439
      %v551 = vpop.f32.mrb[0].mxu0
      %v552 = vadd.f32 0.0, %v551
      %v553 = vpop.f32.mrb[0].mxu0
      %v554 = vpop.f32.mrb[0].mxu0
      %v555 = vadd.f32 0.0, %v554
      %v556 = vpop.f32.mrb[0].mxu0
      %557 = vmatprep.mubr.bf16.mxu0 0
      %558 = vmatmul.mubr.bf16.gmra.mrb[0].mxu0 %v440
      %v559 = vpop.f32.mrb[0].mxu0
      %v560 = vadd.f32 0.0, %v559
      %v561 = vpop.f32.mrb[0].mxu0
      %v562 = vpop.f32.mrb[0].mxu0
      %v563 = vadd.f32 0.0, %v562
      %v564 = vpop.f32.mrb[0].mxu0
      %565 = vmatprep.mubr.bf16.mxu0 0
      %566 = vmatmul.mubr.bf16.gmra.mrb[0].mxu0 %v441
      %v567 = vpop.f32.mrb[0].mxu0
      %v568 = vadd.f32 0.0, %v567
      %v569 = vpop.f32.mrb[0].mxu0
      %v570 = vpop.f32.mrb[0].mxu0
      %v571 = vadd.f32 0.0, %v570
      %v572 = vpop.f32.mrb[0].mxu0
      %573 = vmatprep.mubr.bf16.mxu0 0
      %574 = vmatmul.mubr.bf16.gmra.mrb[0].mxu0 %v442
      %v575 = vpop.f32.mrb[0].mxu0
      %v576 = vadd.f32 0.0, %v575
      %v577 = vpop.f32.mrb[0].mxu0
      %v578 = vpop.f32.mrb[0].mxu0
      %v579 = vadd.f32 0.0, %v578
      %v580 = vpop.f32.mrb[0].mxu0
      %581 = vmatprep.mubr.bf16.mxu0 0
      %582 = vmatmul.mubr.bf16.gmra.mrb[0].mxu0 %v443
      %v583 = vpop.f32.mrb[0].mxu0
      %v584 = vadd.f32 0.0, %v583
      %v585 = vpop.f32.mrb[0].mxu0
      %v586 = vpop.f32.mrb[0].mxu0
      %v587 = vadd.f32 0.0, %v586
      %v588 = vpop.f32.mrb[0].mxu0
      %589 = vmatprep.mubr.bf16.mxu0 0
      %590 = vmatmul.mubr.bf16.gmra.mrb[0].mxu0 %v444
      %v591 = vpop.f32.mrb[0].mxu0
      %v592 = vadd.f32 0.0, %v591
      %v593 = vpop.f32.mrb[0].mxu0
      %v594 = vpop.f32.mrb[0].mxu0
      %v595 = vadd.f32 0.0, %v594
      %v596 = vpop.f32.mrb[0].mxu0
      %597 = vdwg.mxu0
      %v598 = vld [vmem:[#allocation2] sm:$0xff]
      %v599 = vld [vmem:[#allocation2 + $0x8] sm:$0xff]
      %v600 = vld [vmem:[#allocation2 + $0x10] sm:$0xff]
      %v601 = vld [vmem:[#allocation2 + $0x18] sm:$0xff]
      %v602 = vld [vmem:[#allocation2 + $0x20] sm:$0xff]
      %v603 = vld [vmem:[#allocation2 + $0x28] sm:$0xff]
      %v604 = vld [vmem:[#allocation2 + $0x30] sm:$0xff]
      %v605 = vld [vmem:[#allocation2 + $0x38] sm:$0xff]
      %v606 = vld [vmem:[#allocation2 + $0x40] sm:$0xff]
      %v607 = vld [vmem:[#allocation2 + $0x48] sm:$0xff]
      %v608 = vld [vmem:[#allocation2 + $0x50] sm:$0xff]
      %v609 = vld [vmem:[#allocation2 + $0x58] sm:$0xff]
      %v610 = vld [vmem:[#allocation2 + $0x60] sm:$0xff]
      %v611 = vld [vmem:[#allocation2 + $0x68] sm:$0xff]
      %v612 = vld [vmem:[#allocation2 + $0x70] sm:$0xff]
      %v613 = vld [vmem:[#allocation2 + $0x78] sm:$0xff]
      %v614 = vld [vmem:[%s2] sm:$0x1]
      %v616 = vlaneseq
      %v617 = vshrl.u32 %v616, 7
      %v618 = vsub.s32 0, %v617
      %v619 = vrot.slane %v614, %v618
      %v621 = vadd.f32 %v598, %v619
      %v622 = vadd.f32 %v599, %v619
      %v623 = vadd.f32 %v600, %v619
      %v624 = vadd.f32 %v601, %v619
      %v625 = vadd.f32 %v602, %v619
      %v626 = vadd.f32 %v603, %v619
      %v627 = vadd.f32 %v604, %v619
      %v628 = vadd.f32 %v605, %v619
      %v629 = vadd.f32 %v606, %v619
      %v630 = vadd.f32 %v607, %v619
      %v631 = vadd.f32 %v608, %v619
      %v632 = vadd.f32 %v609, %v619
      %v633 = vadd.f32 %v610, %v619
      %v634 = vadd.f32 %v611, %v619
      %v635 = vadd.f32 %v612, %v619
      %v636 = vadd.f32 %v613, %v619
      %v637 = vadd.f32 %v621, %v536
      %v638 = vadd.f32 %v622, %v539
      %v639 = vadd.f32 %v623, %v544
      %v640 = vadd.f32 %v624, %v547
      %v641 = vadd.f32 %v625, %v552
      %v642 = vadd.f32 %v626, %v555
      %v643 = vadd.f32 %v627, %v560
      %v644 = vadd.f32 %v628, %v563
      %v645 = vadd.f32 %v629, %v568
      %v646 = vadd.f32 %v630, %v571
      %v647 = vadd.f32 %v631, %v576
      %v648 = vadd.f32 %v632, %v579
      %v649 = vadd.f32 %v633, %v584
      %v650 = vadd.f32 %v634, %v587
      %v651 = vadd.f32 %v635, %v592
      %v652 = vadd.f32 %v636, %v595
      %653 = vst [vmem:[#allocation11] sm:$0xff] %v637
      %654 = vst [vmem:[#allocation11 + $0x8] sm:$0xff] %v638
      %655 = vst [vmem:[#allocation11 + $0x10] sm:$0xff] %v639
      %656 = vst [vmem:[#allocation11 + $0x18] sm:$0xff] %v640
      %657 = vst [vmem:[#allocation11 + $0x20] sm:$0xff] %v641
      %658 = vst [vmem:[#allocation11 + $0x28] sm:$0xff] %v642
      %659 = vst [vmem:[#allocation11 + $0x30] sm:$0xff] %v643
      %660 = vst [vmem:[#allocation11 + $0x38] sm:$0xff] %v644
      %661 = vst [vmem:[#allocation11 + $0x40] sm:$0xff] %v645
      %662 = vst [vmem:[#allocation11 + $0x48] sm:$0xff] %v646
      %663 = vst [vmem:[#allocation11 + $0x50] sm:$0xff] %v647
      %664 = vst [vmem:[#allocation11 + $0x58] sm:$0xff] %v648
      %665 = vst [vmem:[#allocation11 + $0x60] sm:$0xff] %v649
      %666 = vst [vmem:[#allocation11 + $0x68] sm:$0xff] %v650
      %667 = vst [vmem:[#allocation11 + $0x70] sm:$0xff] %v651
      %668 = vst [vmem:[#allocation11 + $0x78] sm:$0xff] %v652
    $region45: #{tpu_custom_call.1} parent=1 // pred_fallthru
      _
    // Predicated region
    $region46: #{tpu_custom_call.1} parent=1 // pred_check
      _
    $region47: #{tpu_custom_call.1} parent=1 // pred_check_branch
      %670 = sbr.rel (0) target = $region49
    $region48: #{tpu_custom_call.1} parent=1 // pred_region
      %s672 = ssub.s32 2048, 2048
      %673 = vsyncadd [#allocation5], %s672
      %s674 = sshll.u32 [#allocation11], 4
      %s675 = int_to_ptr.vmem [resolvable:$true] %s674
      %680 = dma.vmem_to_hbm [thread:$0]  %s675, 2048, %s5, [#allocation5], 128, 128, 8
    $region49: #{tpu_custom_call.1} parent=1 // pred_fallthru
      _
    // Predicated region
    $region50: #{tpu_custom_call.1} parent=1 // pred_check
      _
    $region51: #{tpu_custom_call.1} parent=1 // pred_check_branch
      %682 = sbr.rel (0) target = $region53
    $region52: #{tpu_custom_call.1} parent=1 // pred_region
      %683 = dma.done [#allocation5], 2048
    $region53: #{tpu_custom_call.1} parent=1 // pred_fallthru
      _
    %684 = vsyncpa [#allocation4], 1
    %685 = vsyncpa [#allocation7], 1
    %686 = vsyncpa [#allocation10], 1
    %687 = vsyncpa [#allocation5], 1

</llo_original>
